<compile_context>
chip_gen: v7x
topology: tpu7x:2x2x1
jax: 0.10.0
libtpu: 0.0.40
codegen_flags: <defaults>
</compile_context>

<pallas_src>
import functools

import jax
import jax.numpy as jnp
from jax import lax
from jax.experimental import pallas as pl
from jax.experimental.pallas import tpu as pltpu


def _ggnn_kernel(time_step, bpp, N, D,
                 adj_ref, nodes_ref,
                 w_big_ref, b_gate_ref, w5u_ref,
                 out_ref):
    M = bpp * N
    D3 = 3 * D

    fan0 = nodes_ref[...].astype(jnp.float32)      # (M, D) node states
    adj = adj_ref[...]                             # (2N, N) = [in_m ; out_m], f32
    w_big = w_big_ref[...]                         # (3D, 3D) fused gate weight
    w5u = w5u_ref[...]                             # (D, D)
    mm_dtype = w_big.dtype                         # f32 (default) or bf16

    # Bias: hoist a materialized broadcast only while it is vreg-cheap.
    if M <= 128:
        b_gate = jnp.broadcast_to(b_gate_ref[...], (M, D3))   # hoisted once
    else:
        b_gate = b_gate_ref[...]                   # (1, 3D): broadcast in the add

    if bpp > 1:
        # Hoisted out of the time loop (loop-invariant).
        adj_b = jnp.broadcast_to(adj, (bpp, 2 * N, N))

    def step(_, fan):
        # --- message passing: [in@fan ; out@fan] ---------------------------
        if bpp == 1:
            m = jnp.dot(adj, fan, preferred_element_type=jnp.float32)  # (2N, D)
            av_in, av_out = m[:N], m[N:]
        else:
            fan3 = fan.reshape(bpp, N, D)
            # (bpp, 2N, N) @ (bpp, N, D) -> (bpp, 2N, D), results land contiguous.
            m_all = lax.dot_general(
                adj_b, fan3,
                dimension_numbers=(((2,), (1,)), ((0,), (0,))),
                preferred_element_type=jnp.float32)
            av_in = m_all[:, :N, :].reshape(M, D)    # tile-aligned when N % 8 == 0
            av_out = m_all[:, N:, :].reshape(M, D)

        # --- fused gates: one (M,3D)@(3D,3D) matmul carries z | r | h -------
        x = jnp.concatenate([av_in, av_out, fan], axis=1).astype(mm_dtype)
        g = jnp.dot(x, w_big, preferred_element_type=jnp.float32) + b_gate

        # z and r columns already contain fan @ w3u; one sigmoid covers both.
        zr = jax.nn.sigmoid(g[:, :2 * D])
        zv = zr[:, :D]
        rv = zr[:, D:]
        hv = jnp.tanh(g[:, 2 * D:]
                      + jnp.dot((rv * fan).astype(mm_dtype), w5u,
                                preferred_element_type=jnp.float32))
        return (1.0 - zv) * fan + zv * hv

    # Small M,D -> raise the full-unroll threshold; otherwise partial unroll
    # so the next step's dots stay visible to the scheduler.
    full_unroll_limit = 16 if (M <= 256 and D <= 64) else 8
    if time_step <= full_unroll_limit:
        fan = fan0
        for _ in range(time_step):
            fan = step(0, fan)
    else:
        fan = lax.fori_loop(0, time_step, step, fan0, unroll=2)

    out_ref[...] = fan.astype(out_ref.dtype)


def ggnn_forward(nodes, in_matrix, out_matrix, params, time_step,
                 *, num_programs=1, gate_matmul_dtype=jnp.float32):
    """nodes: (B, N, D) float32.  Returns (B, N, D).

    time_step must be a static Python int.

    num_programs splits the folded batch across grid programs.  Keep it at 1
    unless each program would get >= ~128-256 rows (bpp*N); at small M the
    split only doubles per-program overhead and weight DMA (true even on v7x
    megacore).  The big throughput lever is folding more graphs per call so
    B*N >= 128 (v5e) / 256 (v6e/v7x).

    gate_matmul_dtype: set jnp.bfloat16 on v6e/v7x once M, D are large; gating
    and accumulation stay f32.
    """
    B, N, D = nodes.shape
    (w3w, b3w, w3u, b3u, w4w, b4w, w5w, b5w, w5u, b5u) = params

    assert B % num_programs == 0, "B must be divisible by num_programs"
    bpp = B // num_programs
    M = B * N
    if num_programs > 1:
        # (8,128) tiling: a non-full node block must be sublane aligned.
        assert (bpp * N) % 8 == 0, "bpp*N must be a multiple of 8 when splitting"

    mdt = gate_matmul_dtype

    # --- wrapper-side weight preparation (pure JAX, jit-fusable) ------------
    # PyTorch Linear: y = x @ W.T + b with W of shape (out, in).
    # Fused (3D, 3D) gate weight: columns are [z | r | h]; row blocks multiply
    # av_in / av_out / fan respectively.  fan's contribution to h is zero
    # because fc_eq5_u acts on (rv * fan), handled separately.
    top = jnp.concatenate([w3w[:, :D].T, w4w[:, :D].T, w5w[:, :D].T], axis=1)
    bot = jnp.concatenate([w3w[:, D:].T, w4w[:, D:].T, w5w[:, D:].T], axis=1)
    urow = jnp.concatenate([w3u.T, w3u.T, jnp.zeros((D, D), w3u.dtype)], axis=1)
    w_big = jnp.concatenate([top, bot, urow], axis=0).astype(mdt)      # (3D, 3D)

    # Pre-summed per-gate biases (b3u shared by z and r; b5u folded into h).
    b_gate = jnp.concatenate([b3w + b3u, b4w + b3u, b5w + b5u]).reshape(1, 3 * D)

    w5u_t = w5u.T.astype(mdt)                                          # (D, D)

    # Stacked adjacency: one (2N, N)@(N, D) dot yields [in@fan ; out@fan].
    # Kept f32 so message passing is exact regardless of gate_matmul_dtype.
    adj = jnp.concatenate([in_matrix, out_matrix], axis=0)             # (2N, N)

    nodes_flat = nodes.reshape(M, D)

    full2 = lambda shape: pl.BlockSpec(shape, lambda i: (0, 0))

    kernel = functools.partial(_ggnn_kernel, time_step, bpp, N, D)

    # Advisory cost estimate so XLA can schedule around this short call.
    flops_per_step = B * (4 * N * N * D + 20 * N * D * D)
    wbytes = jnp.dtype(mdt).itemsize
    cost = pl.CostEstimate(
        flops=time_step * flops_per_step,
        transcendentals=time_step * B * 3 * N * D,
        bytes_accessed=(4 * 2 * M * D                                   # nodes in + out
                        + num_programs * (4 * 2 * N * N                 # adj re-fetch
                                          + wbytes * (9 * D * D + D * D)
                                          + 4 * 3 * D)),
    )

    out_flat = pl.pallas_call(
        kernel,
        out_shape=jax.ShapeDtypeStruct((M, D), nodes.dtype),
        grid_spec=pltpu.PrefetchScalarGridSpec(
            num_scalar_prefetch=0,
            grid=(num_programs,),
            in_specs=[
                full2((2 * N, N)),                               # adj
                pl.BlockSpec((bpp * N, D), lambda i: (i, 0)),    # nodes
                full2((3 * D, 3 * D)),                           # w_big
                full2((1, 3 * D)),                               # b_gate
                full2((D, D)),                                   # w5u
            ],
            out_specs=pl.BlockSpec((bpp * N, D), lambda i: (i, 0)),
        ),
        compiler_params=pltpu.CompilerParams(
            dimension_semantics=("parallel",)),
        cost_estimate=cost,
    )(adj, nodes_flat, w_big, b_gate, w5u_t)

    return out_flat.reshape(B, N, D)


def ggnn_reference(nodes, in_matrix, out_matrix, params, time_step):
    """Pure-JAX reference matching the PyTorch forward."""
    B, N, D = nodes.shape
    (w3w, b3w, w3u, b3u, w4w, b4w, w5w, b5w, w5u, b5u) = params
    in_b = jnp.broadcast_to(in_matrix, (B, N, N))
    out_b = jnp.broadcast_to(out_matrix, (B, N, N))
    fan = nodes
    lin = lambda x, w, b: x @ w.T + b
    for _ in range(time_step):
        av = jnp.concatenate(
            [jnp.einsum("bij,bjd->bid", in_b, fan),
             jnp.einsum("bij,bjd->bid", out_b, fan)], axis=-1)
        av2 = av.reshape(B * N, 2 * D)
        fl = fan.reshape(B * N, D)
        zv = jax.nn.sigmoid(lin(av2, w3w, b3w) + lin(fl, w3u, b3u))
        rv = jax.nn.sigmoid(lin(av2, w4w, b4w) + lin(fl, w3u, b3u))
        hv = jnp.tanh(lin(av2, w5w, b5w) + lin(rv * fl, w5u, b5u))
        fl = (1.0 - zv) * fl + zv * hv
        fan = fl.reshape(B, N, D)
    return fan


if __name__ == "__main__":
    B, N, D = 2, 8, 32
    TIME_STEP = 3

    key = jax.random.PRNGKey(0)
    keys = jax.random.split(key, 16)

    nodes = jax.random.normal(keys[0], (B, N, D), dtype=jnp.float32)
    # Adjacency-like matrices (values in [0, 1)).
    in_matrix = jax.random.uniform(keys[1], (N, N), dtype=jnp.float32)
    out_matrix = jax.random.uniform(keys[2], (N, N), dtype=jnp.float32)

    def init_linear(kw, kb, out_f, in_f):
        bound = 1.0 / (in_f ** 0.5)
        w = jax.random.uniform(kw, (out_f, in_f), jnp.float32, -bound, bound)
        b = jax.random.uniform(kb, (out_f,), jnp.float32, -bound, bound)
        return w, b

    w3w, b3w = init_linear(keys[3], keys[4], D, 2 * D)
    w3u, b3u = init_linear(keys[5], keys[6], D, D)
    w4w, b4w = init_linear(keys[7], keys[8], D, 2 * D)
    # fc_eq4_u exists in __init__ but is unused in forward; created only to
    # consume RNG keys the same way a full port would.
    _w4u, _b4u = init_linear(keys[9], keys[10], D, D)
    w5w, b5w = init_linear(keys[11], keys[12], D, 2 * D)
    w5u, b5u = init_linear(keys[13], keys[14], D, D)

    params = (w3w, b3w, w3u, b3u, w4w, b4w, w5w, b5w, w5u, b5u)

    out = ggnn_forward(nodes, in_matrix, out_matrix, params, TIME_STEP,
                       num_programs=1)
    out = jax.block_until_ready(out)

    ref = ggnn_reference(nodes, in_matrix, out_matrix, params, TIME_STEP)
    assert out.shape == (B, N, D)
    # Slightly looser tolerance: the fused matmul changes f32 summation order
    # relative to the reference.
    assert jnp.allclose(out, ref, atol=1e-4, rtol=1e-4), "mismatch vs reference"

    print("KERNEL_OK")
</pallas_src>

<mosaic_0001>
module attributes {stable_mosaic.version = 11 : i64} {
  func.func @_ggnn_kernel(%arg0: i32, %arg1: memref<16x8xf32, #tpu.memory_space<vmem>>, %arg2: memref<16x32xf32, #tpu.memory_space<vmem>>, %arg3: memref<96x96xf32, #tpu.memory_space<vmem>>, %arg4: memref<1x96xf32, #tpu.memory_space<vmem>>, %arg5: memref<32x32xf32, #tpu.memory_space<vmem>>, %arg6: memref<16x32xf32, #tpu.memory_space<vmem>>) attributes {dimension_semantics = [#tpu.dimension_semantics<parallel>], iteration_bounds = array<i64: 1>, scalar_prefetch = 0 : i64, scratch_operands = 0 : i64, tpu.core_type = #tpu.core_type<tc>, window_params = [{pipeline_mode = #tpu.pipeline_mode<synchronous>, transform_indices = @transform_0, window_bounds = array<i64: 16, 8>}, {transform_indices = @transform_1, window_bounds = array<i64: 16, 32>}, {pipeline_mode = #tpu.pipeline_mode<synchronous>, transform_indices = @transform_2, window_bounds = array<i64: 96, 96>}, {pipeline_mode = #tpu.pipeline_mode<synchronous>, transform_indices = @transform_3, window_bounds = array<i64: 1, 96>}, {pipeline_mode = #tpu.pipeline_mode<synchronous>, transform_indices = @transform_4, window_bounds = array<i64: 32, 32>}, {transform_indices = @transform_5, window_bounds = array<i64: 16, 32>}]} {
    %c0 = arith.constant 0 : index
    %c0_0 = arith.constant 0 : index
    %0 = vector.load %arg2[%c0, %c0_0] : memref<16x32xf32, #tpu.memory_space<vmem>>, vector<16x32xf32>
    %c0_1 = arith.constant 0 : index
    %c0_2 = arith.constant 0 : index
    %1 = vector.load %arg1[%c0_1, %c0_2] : memref<16x8xf32, #tpu.memory_space<vmem>>, vector<16x8xf32>
    %c0_3 = arith.constant 0 : index
    %c0_4 = arith.constant 0 : index
    %2 = vector.load %arg3[%c0_3, %c0_4] : memref<96x96xf32, #tpu.memory_space<vmem>>, vector<96x96xf32>
    %c0_5 = arith.constant 0 : index
    %c0_6 = arith.constant 0 : index
    %3 = vector.load %arg5[%c0_5, %c0_6] : memref<32x32xf32, #tpu.memory_space<vmem>>, vector<32x32xf32>
    %c0_7 = arith.constant 0 : index
    %c0_8 = arith.constant 0 : index
    %4 = vector.load %arg4[%c0_7, %c0_8] : memref<1x96xf32, #tpu.memory_space<vmem>>, vector<1x96xf32>
    %5 = vector.shape_cast %4 : vector<1x96xf32> to vector<1x96xf32>
    %6 = vector.broadcast %5 : vector<1x96xf32> to vector<16x96xf32>
    %7 = vector.shape_cast %1 : vector<16x8xf32> to vector<1x16x8xf32>
    %8 = vector.broadcast %7 : vector<1x16x8xf32> to vector<2x16x8xf32>
    %9 = vector.shape_cast %0 : vector<16x32xf32> to vector<2x8x32xf32>
    %cst = arith.constant dense<0.000000e+00> : vector<2x16x32xf32>
    %10 = tpu.matmul %8, %9, %cst {dimension_numbers = #tpu.dot_dimension_numbers<[2], [1], [1], [2], [0, 0, 0, 1, 1, 2], [0], [0]>} : vector<2x16x8xf32>, vector<2x8x32xf32>, vector<2x16x32xf32> -> vector<2x16x32xf32>
    %11 = vector.extract_strided_slice %10 {offsets = [0, 0, 0], sizes = [2, 8, 32], strides = [1, 1, 1]} : vector<2x16x32xf32> to vector<2x8x32xf32>
    %12 = vector.shape_cast %11 : vector<2x8x32xf32> to vector<16x32xf32>
    %13 = vector.extract_strided_slice %10 {offsets = [0, 8, 0], sizes = [2, 8, 32], strides = [1, 1, 1]} : vector<2x16x32xf32> to vector<2x8x32xf32>
    %14 = vector.shape_cast %13 : vector<2x8x32xf32> to vector<16x32xf32>
    %15 = tpu.concatenate %12, %14, %0 in 1 : vector<16x32xf32>, vector<16x32xf32>, vector<16x32xf32> -> vector<16x96xf32>
    %cst_9 = arith.constant dense<0.000000e+00> : vector<16x96xf32>
    %16 = tpu.matmul %15, %2, %cst_9 {dimension_numbers = #tpu.dot_dimension_numbers<[1], [0], [0], [1], [0, 0, 1, 1], [], []>} : vector<16x96xf32>, vector<96x96xf32>, vector<16x96xf32> -> vector<16x96xf32>
    %17 = arith.addf %16, %6 : vector<16x96xf32>
    %18 = vector.extract_strided_slice %17 {offsets = [0, 0], sizes = [16, 64], strides = [1, 1]} : vector<16x96xf32> to vector<16x64xf32>
    %19 = arith.negf %18 : vector<16x64xf32>
    %20 = math.exp %19 : vector<16x64xf32>
    %cst_10 = arith.constant 1.000000e+00 : f32
    %21 = vector.broadcast %cst_10 : f32 to vector<16x64xf32>
    %22 = arith.addf %21, %20 : vector<16x64xf32>
    %23 = arith.divf %21, %22 : vector<16x64xf32>
    %24 = vector.extract_strided_slice %23 {offsets = [0, 0], sizes = [16, 32], strides = [1, 1]} : vector<16x64xf32> to vector<16x32xf32>
    %25 = vector.extract_strided_slice %23 {offsets = [0, 32], sizes = [16, 32], strides = [1, 1]} : vector<16x64xf32> to vector<16x32xf32>
    %26 = vector.extract_strided_slice %17 {offsets = [0, 64], sizes = [16, 32], strides = [1, 1]} : vector<16x96xf32> to vector<16x32xf32>
    %27 = arith.mulf %25, %0 : vector<16x32xf32>
    %cst_11 = arith.constant dense<0.000000e+00> : vector<16x32xf32>
    %28 = tpu.matmul %27, %3, %cst_11 {dimension_numbers = #tpu.dot_dimension_numbers<[1], [0], [0], [1], [0, 0, 1, 1], [], []>} : vector<16x32xf32>, vector<32x32xf32>, vector<16x32xf32> -> vector<16x32xf32>
    %29 = arith.addf %26, %28 : vector<16x32xf32>
    %30 = math.tanh %29 : vector<16x32xf32>
    %cst_12 = arith.constant 1.000000e+00 : f32
    %31 = vector.broadcast %cst_12 : f32 to vector<16x32xf32>
    %32 = arith.subf %31, %24 : vector<16x32xf32>
    %33 = arith.mulf %32, %0 : vector<16x32xf32>
    %34 = arith.mulf %24, %30 : vector<16x32xf32>
    %35 = arith.addf %33, %34 : vector<16x32xf32>
    %36 = vector.shape_cast %35 : vector<16x32xf32> to vector<2x8x32xf32>
    %cst_13 = arith.constant dense<0.000000e+00> : vector<2x16x32xf32>
    %37 = tpu.matmul %8, %36, %cst_13 {dimension_numbers = #tpu.dot_dimension_numbers<[2], [1], [1], [2], [0, 0, 0, 1, 1, 2], [0], [0]>} : vector<2x16x8xf32>, vector<2x8x32xf32>, vector<2x16x32xf32> -> vector<2x16x32xf32>
    %38 = vector.extract_strided_slice %37 {offsets = [0, 0, 0], sizes = [2, 8, 32], strides = [1, 1, 1]} : vector<2x16x32xf32> to vector<2x8x32xf32>
    %39 = vector.shape_cast %38 : vector<2x8x32xf32> to vector<16x32xf32>
    %40 = vector.extract_strided_slice %37 {offsets = [0, 8, 0], sizes = [2, 8, 32], strides = [1, 1, 1]} : vector<2x16x32xf32> to vector<2x8x32xf32>
    %41 = vector.shape_cast %40 : vector<2x8x32xf32> to vector<16x32xf32>
    %42 = tpu.concatenate %39, %41, %35 in 1 : vector<16x32xf32>, vector<16x32xf32>, vector<16x32xf32> -> vector<16x96xf32>
    %cst_14 = arith.constant dense<0.000000e+00> : vector<16x96xf32>
    %43 = tpu.matmul %42, %2, %cst_14 {dimension_numbers = #tpu.dot_dimension_numbers<[1], [0], [0], [1], [0, 0, 1, 1], [], []>} : vector<16x96xf32>, vector<96x96xf32>, vector<16x96xf32> -> vector<16x96xf32>
    %44 = arith.addf %43, %6 : vector<16x96xf32>
    %45 = vector.extract_strided_slice %44 {offsets = [0, 0], sizes = [16, 64], strides = [1, 1]} : vector<16x96xf32> to vector<16x64xf32>
    %46 = arith.negf %45 : vector<16x64xf32>
    %47 = math.exp %46 : vector<16x64xf32>
    %cst_15 = arith.constant 1.000000e+00 : f32
    %48 = vector.broadcast %cst_15 : f32 to vector<16x64xf32>
    %49 = arith.addf %48, %47 : vector<16x64xf32>
    %50 = arith.divf %48, %49 : vector<16x64xf32>
    %51 = vector.extract_strided_slice %50 {offsets = [0, 0], sizes = [16, 32], strides = [1, 1]} : vector<16x64xf32> to vector<16x32xf32>
    %52 = vector.extract_strided_slice %50 {offsets = [0, 32], sizes = [16, 32], strides = [1, 1]} : vector<16x64xf32> to vector<16x32xf32>
    %53 = vector.extract_strided_slice %44 {offsets = [0, 64], sizes = [16, 32], strides = [1, 1]} : vector<16x96xf32> to vector<16x32xf32>
    %54 = arith.mulf %52, %35 : vector<16x32xf32>
    %cst_16 = arith.constant dense<0.000000e+00> : vector<16x32xf32>
    %55 = tpu.matmul %54, %3, %cst_16 {dimension_numbers = #tpu.dot_dimension_numbers<[1], [0], [0], [1], [0, 0, 1, 1], [], []>} : vector<16x32xf32>, vector<32x32xf32>, vector<16x32xf32> -> vector<16x32xf32>
    %56 = arith.addf %53, %55 : vector<16x32xf32>
    %57 = math.tanh %56 : vector<16x32xf32>
    %cst_17 = arith.constant 1.000000e+00 : f32
    %58 = vector.broadcast %cst_17 : f32 to vector<16x32xf32>
    %59 = arith.subf %58, %51 : vector<16x32xf32>
    %60 = arith.mulf %59, %35 : vector<16x32xf32>
    %61 = arith.mulf %51, %57 : vector<16x32xf32>
    %62 = arith.addf %60, %61 : vector<16x32xf32>
    %63 = vector.shape_cast %62 : vector<16x32xf32> to vector<2x8x32xf32>
    %cst_18 = arith.constant dense<0.000000e+00> : vector<2x16x32xf32>
    %64 = tpu.matmul %8, %63, %cst_18 {dimension_numbers = #tpu.dot_dimension_numbers<[2], [1], [1], [2], [0, 0, 0, 1, 1, 2], [0], [0]>} : vector<2x16x8xf32>, vector<2x8x32xf32>, vector<2x16x32xf32> -> vector<2x16x32xf32>
    %65 = vector.extract_strided_slice %64 {offsets = [0, 0, 0], sizes = [2, 8, 32], strides = [1, 1, 1]} : vector<2x16x32xf32> to vector<2x8x32xf32>
    %66 = vector.shape_cast %65 : vector<2x8x32xf32> to vector<16x32xf32>
    %67 = vector.extract_strided_slice %64 {offsets = [0, 8, 0], sizes = [2, 8, 32], strides = [1, 1, 1]} : vector<2x16x32xf32> to vector<2x8x32xf32>
    %68 = vector.shape_cast %67 : vector<2x8x32xf32> to vector<16x32xf32>
    %69 = tpu.concatenate %66, %68, %62 in 1 : vector<16x32xf32>, vector<16x32xf32>, vector<16x32xf32> -> vector<16x96xf32>
    %cst_19 = arith.constant dense<0.000000e+00> : vector<16x96xf32>
    %70 = tpu.matmul %69, %2, %cst_19 {dimension_numbers = #tpu.dot_dimension_numbers<[1], [0], [0], [1], [0, 0, 1, 1], [], []>} : vector<16x96xf32>, vector<96x96xf32>, vector<16x96xf32> -> vector<16x96xf32>
    %71 = arith.addf %70, %6 : vector<16x96xf32>
    %72 = vector.extract_strided_slice %71 {offsets = [0, 0], sizes = [16, 64], strides = [1, 1]} : vector<16x96xf32> to vector<16x64xf32>
    %73 = arith.negf %72 : vector<16x64xf32>
    %74 = math.exp %73 : vector<16x64xf32>
    %cst_20 = arith.constant 1.000000e+00 : f32
    %75 = vector.broadcast %cst_20 : f32 to vector<16x64xf32>
    %76 = arith.addf %75, %74 : vector<16x64xf32>
    %77 = arith.divf %75, %76 : vector<16x64xf32>
    %78 = vector.extract_strided_slice %77 {offsets = [0, 0], sizes = [16, 32], strides = [1, 1]} : vector<16x64xf32> to vector<16x32xf32>
    %79 = vector.extract_strided_slice %77 {offsets = [0, 32], sizes = [16, 32], strides = [1, 1]} : vector<16x64xf32> to vector<16x32xf32>
    %80 = vector.extract_strided_slice %71 {offsets = [0, 64], sizes = [16, 32], strides = [1, 1]} : vector<16x96xf32> to vector<16x32xf32>
    %81 = arith.mulf %79, %62 : vector<16x32xf32>
    %cst_21 = arith.constant dense<0.000000e+00> : vector<16x32xf32>
    %82 = tpu.matmul %81, %3, %cst_21 {dimension_numbers = #tpu.dot_dimension_numbers<[1], [0], [0], [1], [0, 0, 1, 1], [], []>} : vector<16x32xf32>, vector<32x32xf32>, vector<16x32xf32> -> vector<16x32xf32>
    %83 = arith.addf %80, %82 : vector<16x32xf32>
    %84 = math.tanh %83 : vector<16x32xf32>
    %cst_22 = arith.constant 1.000000e+00 : f32
    %85 = vector.broadcast %cst_22 : f32 to vector<16x32xf32>
    %86 = arith.subf %85, %78 : vector<16x32xf32>
    %87 = arith.mulf %86, %62 : vector<16x32xf32>
    %88 = arith.mulf %78, %84 : vector<16x32xf32>
    %89 = arith.addf %87, %88 : vector<16x32xf32>
    %c0_23 = arith.constant 0 : index
    %c0_24 = arith.constant 0 : index
    %90 = vector.load %arg6[%c0_23, %c0_24] : memref<16x32xf32, #tpu.memory_space<vmem>>, vector<16x32xf32>
    tpu.vector_store %arg6[%c0_23, %c0_24], %89 {strides = array<i32>} : memref<16x32xf32, #tpu.memory_space<vmem>>, vector<16x32xf32>,
    return
  }
  func.func @transform_0(%arg0: i32) -> (i32, i32) {
    %c0_i32 = arith.constant 0 : i32
    %c0_i32_0 = arith.constant 0 : i32
    %c0_i32_1 = arith.constant 0 : i32
    return %c0_i32, %c0_i32_0 : i32, i32
  }
  func.func @transform_1(%arg0: i32) -> (i32, i32) {
    %c0_i32 = arith.constant 0 : i32
    %c0_i32_0 = arith.constant 0 : i32
    return %arg0, %c0_i32 : i32, i32
  }
  func.func @transform_2(%arg0: i32) -> (i32, i32) {
    %c0_i32 = arith.constant 0 : i32
    %c0_i32_0 = arith.constant 0 : i32
    %c0_i32_1 = arith.constant 0 : i32
    return %c0_i32, %c0_i32_0 : i32, i32
  }
  func.func @transform_3(%arg0: i32) -> (i32, i32) {
    %c0_i32 = arith.constant 0 : i32
    %c0_i32_0 = arith.constant 0 : i32
    %c0_i32_1 = arith.constant 0 : i32
    return %c0_i32, %c0_i32_0 : i32, i32
  }
  func.func @transform_4(%arg0: i32) -> (i32, i32) {
    %c0_i32 = arith.constant 0 : i32
    %c0_i32_0 = arith.constant 0 : i32
    %c0_i32_1 = arith.constant 0 : i32
    return %c0_i32, %c0_i32_0 : i32, i32
  }
  func.func @transform_5(%arg0: i32) -> (i32, i32) {
    %c0_i32 = arith.constant 0 : i32
    %c0_i32_0 = arith.constant 0 : i32
    return %arg0, %c0_i32 : i32, i32
  }
}

</mosaic_0001>

<llo_original>
// kernel: tpu_custom_call.1
$region0: #{tpu_custom_call.1}
  #allocation0 [shape = 'u32[]', space=smem, size = 0x4, offset = 0x4, fixed_abs, tag = 'smem constant byte address 0x4 - core index']
  #allocation1 [shape = 'u32[144,128]{1,0:T(1,128)}', space=vmem, size = 0x12000, scoped, tag = 'internal scratch']
  %s0 = inlined_call_operand.vmem [shape: f32[16,8], index: 0, kind: input, shape index: {}]
  %s1 = inlined_call_operand.hbm [shape: f32[16,32], index: 1, kind: input, shape index: {}]
  %s2 = inlined_call_operand.hbm [shape: f32[96,96], index: 2, kind: input, shape index: {}]
  %s3 = inlined_call_operand.vmem [shape: f32[1,96], index: 3, kind: input, shape index: {}]
  %s4 = inlined_call_operand.vmem [shape: f32[32,32], index: 4, kind: input, shape index: {}]
  %s5 = inlined_call_operand.hbm [shape: f32[16,32], index: 5, kind: output, shape index: {}]
  %s6 = sld [smem:[#allocation0]]
  $region38: #{tpu_custom_call.1} parent=0
    _
  %s8 = ssub.s32 1, %s6
  %s9 = scalar_select 0, %s8, %s6
  $region1: #{tpu_custom_call.1} parent=0
    #allocation2 [shape = 'u8[8192]{0}', space=vmem, size = 0x2000, scoped, tag = 'input window, operand 1, single buffered']
    #allocation3 [shape = 's32[1]{0}', space=sflag, size = 0x4, scoped, tag = 'scoped memory for tpu_custom_call.1']
    #allocation4 [shape = 's32[1]{0}', space=sflag, size = 0x4, scoped, tag = 'scoped memory for tpu_custom_call.1']
    #allocation5 [shape = 'u8[49152]{0}', space=vmem, size = 0xc000, scoped, tag = 'input window, operand 2, single buffered']
    #allocation6 [shape = 's32[1]{0}', space=sflag, size = 0x4, scoped, tag = 'scoped memory for tpu_custom_call.1']
    #allocation7 [shape = 'u8[8192]{0}', space=vmem, size = 0x2000, scoped, tag = 'output window, operand 0, single buffered']
    %10 = vsyncpa [#allocation3], 0
    %11 = vsyncpa [#allocation6], 0
    %12 = vsyncpa [#allocation4], 0
    // Predicated region
    $region2: #{tpu_custom_call.1} parent=1 // pred_check
      _
    $region3: #{tpu_custom_call.1} parent=1 // pred_check_branch
      %14 = sbr.rel (0) target = $region5
    $region4: #{tpu_custom_call.1} parent=1 // pred_region
      _
    $region5: #{tpu_custom_call.1} parent=1 // pred_fallthru
      _
    // Predicated region
    $region6: #{tpu_custom_call.1} parent=1 // pred_check
      _
    $region7: #{tpu_custom_call.1} parent=1 // pred_check_branch
      %16 = sbr.rel (0) target = $region9
    $region8: #{tpu_custom_call.1} parent=1 // pred_region
      %s18 = ssub.s32 256, 256
      %19 = vsyncadd [#allocation3], %s18
      %s20 = sshll.u32 [#allocation2], 4
      %s21 = int_to_ptr.vmem [resolvable:$true] %s20
      %26 = dma.hbm_to_vmem [thread:$0]  %s1, 256, %s21, [#allocation3], 128, 128, 8
    $region9: #{tpu_custom_call.1} parent=1 // pred_fallthru
      _
    // Predicated region
    $region10: #{tpu_custom_call.1} parent=1 // pred_check
      _
    $region11: #{tpu_custom_call.1} parent=1 // pred_check_branch
      %28 = sbr.rel (0) target = $region13
    $region12: #{tpu_custom_call.1} parent=1 // pred_region
      %s30 = ssub.s32 1536, 1536
      %31 = vsyncadd [#allocation6], %s30
      %s32 = sshll.u32 [#allocation5], 4
      %s33 = int_to_ptr.vmem [resolvable:$true] %s32
      %38 = dma.hbm_to_vmem [thread:$0]  %s2, 1536, %s33, [#allocation6], 128, 128, 8
    $region13: #{tpu_custom_call.1} parent=1 // pred_fallthru
      _
    // Predicated region
    $region14: #{tpu_custom_call.1} parent=1 // pred_check
      _
    $region15: #{tpu_custom_call.1} parent=1 // pred_check_branch
      %40 = sbr.rel (0) target = $region17
    $region16: #{tpu_custom_call.1} parent=1 // pred_region
      _
    $region17: #{tpu_custom_call.1} parent=1 // pred_fallthru
      _
    // Predicated region
    $region18: #{tpu_custom_call.1} parent=1 // pred_check
      _
    $region19: #{tpu_custom_call.1} parent=1 // pred_check_branch
      %42 = sbr.rel (0) target = $region21
    $region20: #{tpu_custom_call.1} parent=1 // pred_region
      _
    $region21: #{tpu_custom_call.1} parent=1 // pred_fallthru
      _
    // Predicated region
    $region22: #{tpu_custom_call.1} parent=1 // pred_check
      _
    $region23: #{tpu_custom_call.1} parent=1 // pred_check_branch
      %44 = sbr.rel (0) target = $region25
    $region24: #{tpu_custom_call.1} parent=1 // pred_region
      %45 = dma.done [#allocation3], 256
    $region25: #{tpu_custom_call.1} parent=1 // pred_fallthru
      _
    // Predicated region
    $region26: #{tpu_custom_call.1} parent=1 // pred_check
      _
    $region27: #{tpu_custom_call.1} parent=1 // pred_check_branch
      %47 = sbr.rel (0) target = $region29
    $region28: #{tpu_custom_call.1} parent=1 // pred_region
      %48 = dma.done [#allocation6], 1536
    $region29: #{tpu_custom_call.1} parent=1 // pred_fallthru
      _
    %v49 = vld [vmem:[#allocation2] sm:$0xff]
    %v50 = vld [vmem:[#allocation2 + $0x8] sm:$0xff]
    %v51 = vld [vmem:[%s0] sm:$0xff]
    %v52 = vld [vmem:[%s0 + $0x8] sm:$0xff]
    %v53 = vld [vmem:[#allocation5] sm:$0xff]
    %v54 = vld [vmem:[#allocation5 + $0x8] sm:$0xff]
    %v55 = vld [vmem:[#allocation5 + $0x10] sm:$0xff]
    %v56 = vld [vmem:[#allocation5 + $0x18] sm:$0xff]
    %v57 = vld [vmem:[#allocation5 + $0x20] sm:$0xff]
    %v58 = vld [vmem:[#allocation5 + $0x28] sm:$0xff]
    %v59 = vld [vmem:[#allocation5 + $0x30] sm:$0xff]
    %v60 = vld [vmem:[#allocation5 + $0x38] sm:$0xff]
    %v61 = vld [vmem:[#allocation5 + $0x40] sm:$0xff]
    %v62 = vld [vmem:[#allocation5 + $0x48] sm:$0xff]
    %v63 = vld [vmem:[#allocation5 + $0x50] sm:$0xff]
    %v64 = vld [vmem:[#allocation5 + $0x58] sm:$0xff]
    %v65 = vld [vmem:[%s4] sm:$0xff]
    %v66 = vld [vmem:[%s4 + $0x8] sm:$0xff]
    %v67 = vld [vmem:[%s4 + $0x10] sm:$0xff]
    %v68 = vld [vmem:[%s4 + $0x18] sm:$0xff]
    %v69 = vld [vmem:[%s3] sm:$0x1]
    %v71 = vlaneseq
    %v72 = vshrl.u32 %v71, 7
    %v73 = vsub.s32 0, %v72
    %v74 = vrot.slane %v69, %v73
    %vm76 = vcmask 64512
    %v78 = vsel %vm76, %v51, 0
    %v81 = vsel %vm76, %v52, 0
    %83 = vmatprep.subr.mxu0 0.0
    %84 = vmatpush1.msra.mxu0 %v49
    %85 = vmatprep.subr.mxu0 0.0
    %86 = vmatpush1.msra.mxu0 0.0
    %87 = vmatprep.subr.mxu0 0.0
    %88 = vmatpush1.msra.mxu0 0.0
    %89 = vmatprep.subr.mxu0 0.0
    %90 = vmatpush1.msra.mxu0 0.0
    %91 = vmatprep.subr.mxu0 0.0
    %92 = vmatpush1.msra.mxu0 0.0
    %93 = vmatprep.subr.mxu0 0.0
    %94 = vmatpush1.msra.mxu0 0.0
    %95 = vmatprep.subr.mxu0 0.0
    %96 = vmatpush1.msra.mxu0 0.0
    %97 = vmatprep.subr.mxu0 0.0
    %98 = vmatpush1.msra.mxu0 0.0
    %99 = vmatprep.subr.mxu0 0.0
    %100 = vmatpush1.msra.mxu0 0.0
    %101 = vmatprep.subr.mxu0 0.0
    %102 = vmatpush1.msra.mxu0 0.0
    %103 = vmatprep.subr.mxu0 0.0
    %104 = vmatpush1.msra.mxu0 0.0
    %105 = vmatprep.subr.mxu0 0.0
    %106 = vmatpush1.msra.mxu0 0.0
    %107 = vmatprep.subr.mxu0 0.0
    %108 = vmatpush1.msra.mxu0 0.0
    %109 = vmatprep.subr.mxu0 0.0
    %110 = vmatpush1.msra.mxu0 0.0
    %111 = vmatprep.subr.mxu0 0.0
    %112 = vmatpush1.msra.mxu0 0.0
    %113 = vmatprep.subr.mxu0 0.0
    %114 = vmatpush1.msra.mxu0 0.0
    %115 = vmatprep.subr.mxu0 0.0
    %116 = vmatpush1.msra.mxu0 0.0
    %117 = vmatprep.subr.mxu0 0.0
    %118 = vmatpush1.msra.mxu0 0.0
    %119 = vmatprep.subr.mxu0 0.0
    %120 = vmatpush1.msra.mxu0 0.0
    %121 = vmatprep.subr.mxu0 0.0
    %122 = vmatpush1.msra.mxu0 0.0
    %123 = vmatprep.subr.mxu0 0.0
    %124 = vmatpush1.msra.mxu0 0.0
    %125 = vmatprep.subr.mxu0 0.0
    %126 = vmatpush1.msra.mxu0 0.0
    %127 = vmatprep.subr.mxu0 0.0
    %128 = vmatpush1.msra.mxu0 0.0
    %129 = vmatprep.subr.mxu0 0.0
    %130 = vmatpush1.msra.mxu0 0.0
    %131 = vmatprep.subr.mxu0 0.0
    %132 = vmatpush1.msra.mxu0 0.0
    %133 = vmatprep.subr.mxu0 0.0
    %134 = vmatpush1.msra.mxu0 0.0
    %135 = vmatprep.subr.mxu0 0.0
    %136 = vmatpush1.msra.mxu0 0.0
    %137 = vmatprep.subr.mxu0 0.0
    %138 = vmatpush1.msra.mxu0 0.0
    %139 = vmatprep.subr.mxu0 0.0
    %140 = vmatpush1.msra.mxu0 0.0
    %141 = vmatprep.subr.mxu0 0.0
    %142 = vmatpush1.msra.mxu0 0.0
    %143 = vmatprep.subr.mxu0 0.0
    %144 = vmatpush1.msra.mxu0 0.0
    %145 = vmatprep.subr.mxu0 0.0
    %146 = vmatpush1.msra.mxu0 0.0
    %147 = vmatprep.mubr.f32.mxu0 0.0
    %148 = vmatmul.mubr.f32.gmra.mrb[0].mxu0 %v78
    %v149 = vpop.f32.mrb[0].mxu0
    %v150 = vadd.f32 0.0, %v149
    %v151 = vpop.f32.mrb[0].mxu0
    %152 = vmatprep.mubr.f32.mxu0 0.0
    %153 = vmatmul.mubr.f32.gmra.mrb[0].mxu0 %v81
    %v154 = vpop.f32.mrb[0].mxu0
    %v155 = vadd.f32 0.0, %v154
    %v156 = vpop.f32.mrb[0].mxu0
    %157 = vdwg.mxu0
    %158 = vmatprep.subr.mxu0 0.0
    %159 = vmatpush1.msra.mxu0 %v50
    %160 = vmatprep.subr.mxu0 0.0
    %161 = vmatpush1.msra.mxu0 0.0
    %162 = vmatprep.subr.mxu0 0.0
    %163 = vmatpush1.msra.mxu0 0.0
    %164 = vmatprep.subr.mxu0 0.0
    %165 = vmatpush1.msra.mxu0 0.0
    %166 = vmatprep.subr.mxu0 0.0
    %167 = vmatpush1.msra.mxu0 0.0
    %168 = vmatprep.subr.mxu0 0.0
    %169 = vmatpush1.msra.mxu0 0.0
    %170 = vmatprep.subr.mxu0 0.0
    %171 = vmatpush1.msra.mxu0 0.0
    %172 = vmatprep.subr.mxu0 0.0
    %173 = vmatpush1.msra.mxu0 0.0
    %174 = vmatprep.subr.mxu0 0.0
    %175 = vmatpush1.msra.mxu0 0.0
    %176 = vmatprep.subr.mxu0 0.0
    %177 = vmatpush1.msra.mxu0 0.0
    %178 = vmatprep.subr.mxu0 0.0
    %179 = vmatpush1.msra.mxu0 0.0
    %180 = vmatprep.subr.mxu0 0.0
    %181 = vmatpush1.msra.mxu0 0.0
    %182 = vmatprep.subr.mxu0 0.0
    %183 = vmatpush1.msra.mxu0 0.0
    %184 = vmatprep.subr.mxu0 0.0
    %185 = vmatpush1.msra.mxu0 0.0
    %186 = vmatprep.subr.mxu0 0.0
    %187 = vmatpush1.msra.mxu0 0.0
    %188 = vmatprep.subr.mxu0 0.0
    %189 = vmatpush1.msra.mxu0 0.0
    %190 = vmatprep.subr.mxu0 0.0
    %191 = vmatpush1.msra.mxu0 0.0
    %192 = vmatprep.subr.mxu0 0.0
    %193 = vmatpush1.msra.mxu0 0.0
    %194 = vmatprep.subr.mxu0 0.0
    %195 = vmatpush1.msra.mxu0 0.0
    %196 = vmatprep.subr.mxu0 0.0
    %197 = vmatpush1.msra.mxu0 0.0
    %198 = vmatprep.subr.mxu0 0.0
    %199 = vmatpush1.msra.mxu0 0.0
    %200 = vmatprep.subr.mxu0 0.0
    %201 = vmatpush1.msra.mxu0 0.0
    %202 = vmatprep.subr.mxu0 0.0
    %203 = vmatpush1.msra.mxu0 0.0
    %204 = vmatprep.subr.mxu0 0.0
    %205 = vmatpush1.msra.mxu0 0.0
    %206 = vmatprep.subr.mxu0 0.0
    %207 = vmatpush1.msra.mxu0 0.0
    %208 = vmatprep.subr.mxu0 0.0
    %209 = vmatpush1.msra.mxu0 0.0
    %210 = vmatprep.subr.mxu0 0.0
    %211 = vmatpush1.msra.mxu0 0.0
    %212 = vmatprep.subr.mxu0 0.0
    %213 = vmatpush1.msra.mxu0 0.0
    %214 = vmatprep.subr.mxu0 0.0
    %215 = vmatpush1.msra.mxu0 0.0
    %216 = vmatprep.subr.mxu0 0.0
    %217 = vmatpush1.msra.mxu0 0.0
    %218 = vmatprep.subr.mxu0 0.0
    %219 = vmatpush1.msra.mxu0 0.0
    %220 = vmatprep.subr.mxu0 0.0
    %221 = vmatpush1.msra.mxu0 0.0
    %222 = vmatprep.mubr.f32.mxu0 0.0
    %223 = vmatmul.mubr.f32.gmra.mrb[0].mxu0 %v78
    %v224 = vpop.f32.mrb[0].mxu0
    %v225 = vadd.f32 0.0, %v224
    %v226 = vpop.f32.mrb[0].mxu0
    %227 = vmatprep.mubr.f32.mxu0 0.0
    %228 = vmatmul.mubr.f32.gmra.mrb[0].mxu0 %v81
    %v229 = vpop.f32.mrb[0].mxu0
    %v230 = vadd.f32 0.0, %v229
    %v231 = vpop.f32.mrb[0].mxu0
    %232 = vdwg.mxu0
    %235 = vrot.lane.b32.xlu0 %v155, 32
    %v236 = vpop.permute.xlu0 %235
    %237 = vrot.lane.b32.xlu0 %v230, 32
    %v238 = vpop.permute.xlu0 %237
    %243 = vrot.lane.b32.xlu0 %v49, 64
    %v244 = vpop.permute.xlu0 %243
    %245 = vrot.lane.b32.xlu0 %v50, 64
    %v246 = vpop.permute.xlu0 %245
    %vm249 = vcmask 261120
    %v250 = vsel %vm249, %v150, %v236
    %v251 = vsel %vm249, %v225, %v238
    %vm252 = vcmask 523264
    %v253 = vsel %vm252, %v250, %v244
    %v254 = vsel %vm252, %v251, %v246
    %vm255 = vcmask 785408
    %v257 = vsel %vm255, %v253, 0
    %v260 = vsel %vm255, %v254, 0
    %262 = vmatprep.subr.mxu0 0.0
    %263 = vmatpush1.msra.mxu0 %v53
    %264 = vmatprep.subr.mxu0 0.0
    %265 = vmatpush1.msra.mxu0 %v54
    %266 = vmatprep.subr.mxu0 0.0
    %267 = vmatpush1.msra.mxu0 %v55
    %268 = vmatprep.subr.mxu0 0.0
    %269 = vmatpush1.msra.mxu0 %v56
    %270 = vmatprep.subr.mxu0 0.0
    %271 = vmatpush1.msra.mxu0 %v57
    %272 = vmatprep.subr.mxu0 0.0
    %273 = vmatpush1.msra.mxu0 %v58
    %274 = vmatprep.subr.mxu0 0.0
    %275 = vmatpush1.msra.mxu0 %v59
    %276 = vmatprep.subr.mxu0 0.0
    %277 = vmatpush1.msra.mxu0 %v60
    %278 = vmatprep.subr.mxu0 0.0
    %279 = vmatpush1.msra.mxu0 %v61
    %280 = vmatprep.subr.mxu0 0.0
    %281 = vmatpush1.msra.mxu0 %v62
    %282 = vmatprep.subr.mxu0 0.0
    %283 = vmatpush1.msra.mxu0 %v63
    %284 = vmatprep.subr.mxu0 0.0
    %285 = vmatpush1.msra.mxu0 %v64
    %286 = vmatprep.subr.mxu0 0.0
    %287 = vmatpush1.msra.mxu0 0.0
    %288 = vmatprep.subr.mxu0 0.0
    %289 = vmatpush1.msra.mxu0 0.0
    %290 = vmatprep.subr.mxu0 0.0
    %291 = vmatpush1.msra.mxu0 0.0
    %292 = vmatprep.subr.mxu0 0.0
    %293 = vmatpush1.msra.mxu0 0.0
    %294 = vmatprep.subr.mxu0 0.0
    %295 = vmatpush1.msra.mxu0 0.0
    %296 = vmatprep.subr.mxu0 0.0
    %297 = vmatpush1.msra.mxu0 0.0
    %298 = vmatprep.subr.mxu0 0.0
    %299 = vmatpush1.msra.mxu0 0.0
    %300 = vmatprep.subr.mxu0 0.0
    %301 = vmatpush1.msra.mxu0 0.0
    %302 = vmatprep.subr.mxu0 0.0
    %303 = vmatpush1.msra.mxu0 0.0
    %304 = vmatprep.subr.mxu0 0.0
    %305 = vmatpush1.msra.mxu0 0.0
    %306 = vmatprep.subr.mxu0 0.0
    %307 = vmatpush1.msra.mxu0 0.0
    %308 = vmatprep.subr.mxu0 0.0
    %309 = vmatpush1.msra.mxu0 0.0
    %310 = vmatprep.subr.mxu0 0.0
    %311 = vmatpush1.msra.mxu0 0.0
    %312 = vmatprep.subr.mxu0 0.0
    %313 = vmatpush1.msra.mxu0 0.0
    %314 = vmatprep.subr.mxu0 0.0
    %315 = vmatpush1.msra.mxu0 0.0
    %316 = vmatprep.subr.mxu0 0.0
    %317 = vmatpush1.msra.mxu0 0.0
    %318 = vmatprep.subr.mxu0 0.0
    %319 = vmatpush1.msra.mxu0 0.0
    %320 = vmatprep.subr.mxu0 0.0
    %321 = vmatpush1.msra.mxu0 0.0
    %322 = vmatprep.subr.mxu0 0.0
    %323 = vmatpush1.msra.mxu0 0.0
    %324 = vmatprep.subr.mxu0 0.0
    %325 = vmatpush1.msra.mxu0 0.0
    %326 = vmatprep.mubr.f32.mxu0 0.0
    %327 = vmatmul.mubr.f32.gmra.mrb[0].mxu0 %v257
    %v328 = vpop.f32.mrb[0].mxu0
    %v329 = vadd.f32 %v74, %v328
    %v330 = vpop.f32.mrb[0].mxu0
    %331 = vmatprep.mubr.f32.mxu0 0.0
    %332 = vmatmul.mubr.f32.gmra.mrb[0].mxu0 %v260
    %v333 = vpop.f32.mrb[0].mxu0
    %v334 = vadd.f32 %v74, %v333
    %v335 = vpop.f32.mrb[0].mxu0
    %336 = vdwg.mxu0
    %v337 = vxor.u32 %v329, 2147483648
    %v338 = vxor.u32 %v334, 2147483648
    %v339 = vmul.f32 %v337, 1.442695
    %v340 = vpow.pop %v339
    %v341 = vmul.f32 %v338, 1.442695
    %v342 = vpow.pop %v341
    %v343 = vadd.f32 %v340, 1.0
    %v344 = vadd.f32 %v342, 1.0
    %v345 = vrcp.pop %v343
    %v346 = vmul.f32 1.0, %v345
    %v347 = vrcp.pop %v344
    %v348 = vmul.f32 1.0, %v347
    %349 = vrot.lane.b32.xlu0 %v49, 32
    %v350 = vpop.permute.xlu0 %349
    %351 = vrot.lane.b32.xlu0 %v50, 32
    %v352 = vpop.permute.xlu0 %351
    %v355 = vmul.f32 %v346, %v350
    %v356 = vmul.f32 %v348, %v352
    %359 = vrot.lane.b32.xlu0 %v355, 96
    %v360 = vpop.permute.xlu0 %359
    %361 = vrot.lane.b32.xlu0 %v356, 96
    %v362 = vpop.permute.xlu0 %361
    %v363 = vsel %vm249, %v360, 0
    %v365 = vsel %vm249, %v362, 0
    %367 = vmatprep.subr.mxu0 0.0
    %368 = vmatpush1.msra.mxu0 %v65
    %369 = vmatprep.subr.mxu0 0.0
    %370 = vmatpush1.msra.mxu0 %v66
    %371 = vmatprep.subr.mxu0 0.0
    %372 = vmatpush1.msra.mxu0 %v67
    %373 = vmatprep.subr.mxu0 0.0
    %374 = vmatpush1.msra.mxu0 %v68
    %375 = vmatprep.subr.mxu0 0.0
    %376 = vmatpush1.msra.mxu0 0.0
    %377 = vmatprep.subr.mxu0 0.0
    %378 = vmatpush1.msra.mxu0 0.0
    %379 = vmatprep.subr.mxu0 0.0
    %380 = vmatpush1.msra.mxu0 0.0
    %381 = vmatprep.subr.mxu0 0.0
    %382 = vmatpush1.msra.mxu0 0.0
    %383 = vmatprep.subr.mxu0 0.0
    %384 = vmatpush1.msra.mxu0 0.0
    %385 = vmatprep.subr.mxu0 0.0
    %386 = vmatpush1.msra.mxu0 0.0
    %387 = vmatprep.subr.mxu0 0.0
    %388 = vmatpush1.msra.mxu0 0.0
    %389 = vmatprep.subr.mxu0 0.0
    %390 = vmatpush1.msra.mxu0 0.0
    %391 = vmatprep.subr.mxu0 0.0
    %392 = vmatpush1.msra.mxu0 0.0
    %393 = vmatprep.subr.mxu0 0.0
    %394 = vmatpush1.msra.mxu0 0.0
    %395 = vmatprep.subr.mxu0 0.0
    %396 = vmatpush1.msra.mxu0 0.0
    %397 = vmatprep.subr.mxu0 0.0
    %398 = vmatpush1.msra.mxu0 0.0
    %399 = vmatprep.subr.mxu0 0.0
    %400 = vmatpush1.msra.mxu0 0.0
    %401 = vmatprep.subr.mxu0 0.0
    %402 = vmatpush1.msra.mxu0 0.0
    %403 = vmatprep.subr.mxu0 0.0
    %404 = vmatpush1.msra.mxu0 0.0
    %405 = vmatprep.subr.mxu0 0.0
    %406 = vmatpush1.msra.mxu0 0.0
    %407 = vmatprep.subr.mxu0 0.0
    %408 = vmatpush1.msra.mxu0 0.0
    %409 = vmatprep.subr.mxu0 0.0
    %410 = vmatpush1.msra.mxu0 0.0
    %411 = vmatprep.subr.mxu0 0.0
    %412 = vmatpush1.msra.mxu0 0.0
    %413 = vmatprep.subr.mxu0 0.0
    %414 = vmatpush1.msra.mxu0 0.0
    %415 = vmatprep.subr.mxu0 0.0
    %416 = vmatpush1.msra.mxu0 0.0
    %417 = vmatprep.subr.mxu0 0.0
    %418 = vmatpush1.msra.mxu0 0.0
    %419 = vmatprep.subr.mxu0 0.0
    %420 = vmatpush1.msra.mxu0 0.0
    %421 = vmatprep.subr.mxu0 0.0
    %422 = vmatpush1.msra.mxu0 0.0
    %423 = vmatprep.subr.mxu0 0.0
    %424 = vmatpush1.msra.mxu0 0.0
    %425 = vmatprep.subr.mxu0 0.0
    %426 = vmatpush1.msra.mxu0 0.0
    %427 = vmatprep.subr.mxu0 0.0
    %428 = vmatpush1.msra.mxu0 0.0
    %429 = vmatprep.subr.mxu0 0.0
    %430 = vmatpush1.msra.mxu0 0.0
    %431 = vmatprep.mubr.f32.mxu0 0.0
    %432 = vmatmul.mubr.f32.gmra.mrb[0].mxu0 %v363
    %v433 = vpop.f32.mrb[0].mxu0
    %v434 = vadd.f32 0.0, %v433
    %v435 = vpop.f32.mrb[0].mxu0
    %436 = vmatprep.mubr.f32.mxu0 0.0
    %437 = vmatmul.mubr.f32.gmra.mrb[0].mxu0 %v365
    %v438 = vpop.f32.mrb[0].mxu0
    %v439 = vadd.f32 0.0, %v438
    %v440 = vpop.f32.mrb[0].mxu0
    %441 = vdwg.mxu0
    %444 = vrot.lane.b32.xlu0 %v434, 64
    %v445 = vpop.permute.xlu0 %444
    %446 = vrot.lane.b32.xlu0 %v439, 64
    %v447 = vpop.permute.xlu0 %446
    %v450 = vadd.f32 %v329, %v445
    %v451 = vadd.f32 %v334, %v447
    %v452 = vtanh.pop %v450
    %v453 = vtanh.pop %v451
    %v454 = vsub.f32 1.0, %v346
    %v455 = vsub.f32 1.0, %v348
    %v456 = vmul.f32 %v454, %v49
    %v457 = vmul.f32 %v455, %v50
    %460 = vrot.lane.b32.xlu0 %v452, 64
    %v461 = vpop.permute.xlu0 %460
    %462 = vrot.lane.b32.xlu0 %v453, 64
    %v463 = vpop.permute.xlu0 %462
    %v466 = vmul.f32 %v346, %v461
    %v467 = vmul.f32 %v348, %v463
    %v468 = vadd.f32 %v456, %v466
    %v469 = vadd.f32 %v457, %v467
    %470 = vmatprep.subr.mxu0 0.0
    %471 = vmatpush1.msra.mxu0 %v468
    %472 = vmatprep.subr.mxu0 0.0
    %473 = vmatpush1.msra.mxu0 0.0
    %474 = vmatprep.subr.mxu0 0.0
    %475 = vmatpush1.msra.mxu0 0.0
    %476 = vmatprep.subr.mxu0 0.0
    %477 = vmatpush1.msra.mxu0 0.0
    %478 = vmatprep.subr.mxu0 0.0
    %479 = vmatpush1.msra.mxu0 0.0
    %480 = vmatprep.subr.mxu0 0.0
    %481 = vmatpush1.msra.mxu0 0.0
    %482 = vmatprep.subr.mxu0 0.0
    %483 = vmatpush1.msra.mxu0 0.0
    %484 = vmatprep.subr.mxu0 0.0
    %485 = vmatpush1.msra.mxu0 0.0
    %486 = vmatprep.subr.mxu0 0.0
    %487 = vmatpush1.msra.mxu0 0.0
    %488 = vmatprep.subr.mxu0 0.0
    %489 = vmatpush1.msra.mxu0 0.0
    %490 = vmatprep.subr.mxu0 0.0
    %491 = vmatpush1.msra.mxu0 0.0
    %492 = vmatprep.subr.mxu0 0.0
    %493 = vmatpush1.msra.mxu0 0.0
    %494 = vmatprep.subr.mxu0 0.0
    %495 = vmatpush1.msra.mxu0 0.0
    %496 = vmatprep.subr.mxu0 0.0
    %497 = vmatpush1.msra.mxu0 0.0
    %498 = vmatprep.subr.mxu0 0.0
    %499 = vmatpush1.msra.mxu0 0.0
    %500 = vmatprep.subr.mxu0 0.0
    %501 = vmatpush1.msra.mxu0 0.0
    %502 = vmatprep.subr.mxu0 0.0
    %503 = vmatpush1.msra.mxu0 0.0
    %504 = vmatprep.subr.mxu0 0.0
    %505 = vmatpush1.msra.mxu0 0.0
    %506 = vmatprep.subr.mxu0 0.0
    %507 = vmatpush1.msra.mxu0 0.0
    %508 = vmatprep.subr.mxu0 0.0
    %509 = vmatpush1.msra.mxu0 0.0
    %510 = vmatprep.subr.mxu0 0.0
    %511 = vmatpush1.msra.mxu0 0.0
    %512 = vmatprep.subr.mxu0 0.0
    %513 = vmatpush1.msra.mxu0 0.0
    %514 = vmatprep.subr.mxu0 0.0
    %515 = vmatpush1.msra.mxu0 0.0
    %516 = vmatprep.subr.mxu0 0.0
    %517 = vmatpush1.msra.mxu0 0.0
    %518 = vmatprep.subr.mxu0 0.0
    %519 = vmatpush1.msra.mxu0 0.0
    %520 = vmatprep.subr.mxu0 0.0
    %521 = vmatpush1.msra.mxu0 0.0
    %522 = vmatprep.subr.mxu0 0.0
    %523 = vmatpush1.msra.mxu0 0.0
    %524 = vmatprep.subr.mxu0 0.0
    %525 = vmatpush1.msra.mxu0 0.0
    %526 = vmatprep.subr.mxu0 0.0
    %527 = vmatpush1.msra.mxu0 0.0
    %528 = vmatprep.subr.mxu0 0.0
    %529 = vmatpush1.msra.mxu0 0.0
    %530 = vmatprep.subr.mxu0 0.0
    %531 = vmatpush1.msra.mxu0 0.0
    %532 = vmatprep.subr.mxu0 0.0
    %533 = vmatpush1.msra.mxu0 0.0
    %534 = vmatprep.mubr.f32.mxu0 0.0
    %535 = vmatmul.mubr.f32.gmra.mrb[0].mxu0 %v78
    %v536 = vpop.f32.mrb[0].mxu0
    %v537 = vadd.f32 0.0, %v536
    %v538 = vpop.f32.mrb[0].mxu0
    %539 = vmatprep.mubr.f32.mxu0 0.0
    %540 = vmatmul.mubr.f32.gmra.mrb[0].mxu0 %v81
    %v541 = vpop.f32.mrb[0].mxu0
    %v542 = vadd.f32 0.0, %v541
    %v543 = vpop.f32.mrb[0].mxu0
    %544 = vdwg.mxu0
    %545 = vmatprep.subr.mxu0 0.0
    %546 = vmatpush1.msra.mxu0 %v469
    %547 = vmatprep.subr.mxu0 0.0
    %548 = vmatpush1.msra.mxu0 0.0
    %549 = vmatprep.subr.mxu0 0.0
    %550 = vmatpush1.msra.mxu0 0.0
    %551 = vmatprep.subr.mxu0 0.0
    %552 = vmatpush1.msra.mxu0 0.0
    %553 = vmatprep.subr.mxu0 0.0
    %554 = vmatpush1.msra.mxu0 0.0
    %555 = vmatprep.subr.mxu0 0.0
    %556 = vmatpush1.msra.mxu0 0.0
    %557 = vmatprep.subr.mxu0 0.0
    %558 = vmatpush1.msra.mxu0 0.0
    %559 = vmatprep.subr.mxu0 0.0
    %560 = vmatpush1.msra.mxu0 0.0
    %561 = vmatprep.subr.mxu0 0.0
    %562 = vmatpush1.msra.mxu0 0.0
    %563 = vmatprep.subr.mxu0 0.0
    %564 = vmatpush1.msra.mxu0 0.0
    %565 = vmatprep.subr.mxu0 0.0
    %566 = vmatpush1.msra.mxu0 0.0
    %567 = vmatprep.subr.mxu0 0.0
    %568 = vmatpush1.msra.mxu0 0.0
    %569 = vmatprep.subr.mxu0 0.0
    %570 = vmatpush1.msra.mxu0 0.0
    %571 = vmatprep.subr.mxu0 0.0
    %572 = vmatpush1.msra.mxu0 0.0
    %573 = vmatprep.subr.mxu0 0.0
    %574 = vmatpush1.msra.mxu0 0.0
    %575 = vmatprep.subr.mxu0 0.0
    %576 = vmatpush1.msra.mxu0 0.0
    %577 = vmatprep.subr.mxu0 0.0
    %578 = vmatpush1.msra.mxu0 0.0
    %579 = vmatprep.subr.mxu0 0.0
    %580 = vmatpush1.msra.mxu0 0.0
    %581 = vmatprep.subr.mxu0 0.0
    %582 = vmatpush1.msra.mxu0 0.0
    %583 = vmatprep.subr.mxu0 0.0
    %584 = vmatpush1.msra.mxu0 0.0
    %585 = vmatprep.subr.mxu0 0.0
    %586 = vmatpush1.msra.mxu0 0.0
    %587 = vmatprep.subr.mxu0 0.0
    %588 = vmatpush1.msra.mxu0 0.0
    %589 = vmatprep.subr.mxu0 0.0
    %590 = vmatpush1.msra.mxu0 0.0
    %591 = vmatprep.subr.mxu0 0.0
    %592 = vmatpush1.msra.mxu0 0.0
    %593 = vmatprep.subr.mxu0 0.0
    %594 = vmatpush1.msra.mxu0 0.0
    %595 = vmatprep.subr.mxu0 0.0
    %596 = vmatpush1.msra.mxu0 0.0
    %597 = vmatprep.subr.mxu0 0.0
    %598 = vmatpush1.msra.mxu0 0.0
    %599 = vmatprep.subr.mxu0 0.0
    %600 = vmatpush1.msra.mxu0 0.0
    %601 = vmatprep.subr.mxu0 0.0
    %602 = vmatpush1.msra.mxu0 0.0
    %603 = vmatprep.subr.mxu0 0.0
    %604 = vmatpush1.msra.mxu0 0.0
    %605 = vmatprep.subr.mxu0 0.0
    %606 = vmatpush1.msra.mxu0 0.0
    %607 = vmatprep.subr.mxu0 0.0
    %608 = vmatpush1.msra.mxu0 0.0
    %609 = vmatprep.mubr.f32.mxu0 0.0
    %610 = vmatmul.mubr.f32.gmra.mrb[0].mxu0 %v78
    %v611 = vpop.f32.mrb[0].mxu0
    %v612 = vadd.f32 0.0, %v611
    %v613 = vpop.f32.mrb[0].mxu0
    %614 = vmatprep.mubr.f32.mxu0 0.0
    %615 = vmatmul.mubr.f32.gmra.mrb[0].mxu0 %v81
    %v616 = vpop.f32.mrb[0].mxu0
    %v617 = vadd.f32 0.0, %v616
    %v618 = vpop.f32.mrb[0].mxu0
    %619 = vdwg.mxu0
    %622 = vrot.lane.b32.xlu0 %v542, 32
    %v623 = vpop.permute.xlu0 %622
    %624 = vrot.lane.b32.xlu0 %v617, 32
    %v625 = vpop.permute.xlu0 %624
    %630 = vrot.lane.b32.xlu0 %v468, 64
    %v631 = vpop.permute.xlu0 %630
    %632 = vrot.lane.b32.xlu0 %v469, 64
    %v633 = vpop.permute.xlu0 %632
    %v636 = vsel %vm249, %v537, %v623
    %v637 = vsel %vm249, %v612, %v625
    %v638 = vsel %vm252, %v636, %v631
    %v639 = vsel %vm252, %v637, %v633
    %v641 = vsel %vm255, %v638, 0
    %v644 = vsel %vm255, %v639, 0
    %646 = vmatprep.subr.mxu0 0.0
    %647 = vmatpush1.msra.mxu0 %v53
    %648 = vmatprep.subr.mxu0 0.0
    %649 = vmatpush1.msra.mxu0 %v54
    %650 = vmatprep.subr.mxu0 0.0
    %651 = vmatpush1.msra.mxu0 %v55
    %652 = vmatprep.subr.mxu0 0.0
    %653 = vmatpush1.msra.mxu0 %v56
    %654 = vmatprep.subr.mxu0 0.0
    %655 = vmatpush1.msra.mxu0 %v57
    %656 = vmatprep.subr.mxu0 0.0
    %657 = vmatpush1.msra.mxu0 %v58
    %658 = vmatprep.subr.mxu0 0.0
    %659 = vmatpush1.msra.mxu0 %v59
    %660 = vmatprep.subr.mxu0 0.0
    %661 = vmatpush1.msra.mxu0 %v60
    %662 = vmatprep.subr.mxu0 0.0
    %663 = vmatpush1.msra.mxu0 %v61
    %664 = vmatprep.subr.mxu0 0.0
    %665 = vmatpush1.msra.mxu0 %v62
    %666 = vmatprep.subr.mxu0 0.0
    %667 = vmatpush1.msra.mxu0 %v63
    %668 = vmatprep.subr.mxu0 0.0
    %669 = vmatpush1.msra.mxu0 %v64
    %670 = vmatprep.subr.mxu0 0.0
    %671 = vmatpush1.msra.mxu0 0.0
    %672 = vmatprep.subr.mxu0 0.0
    %673 = vmatpush1.msra.mxu0 0.0
    %674 = vmatprep.subr.mxu0 0.0
    %675 = vmatpush1.msra.mxu0 0.0
    %676 = vmatprep.subr.mxu0 0.0
    %677 = vmatpush1.msra.mxu0 0.0
    %678 = vmatprep.subr.mxu0 0.0
    %679 = vmatpush1.msra.mxu0 0.0
    %680 = vmatprep.subr.mxu0 0.0
    %681 = vmatpush1.msra.mxu0 0.0
    %682 = vmatprep.subr.mxu0 0.0
    %683 = vmatpush1.msra.mxu0 0.0
    %684 = vmatprep.subr.mxu0 0.0
    %685 = vmatpush1.msra.mxu0 0.0
    %686 = vmatprep.subr.mxu0 0.0
    %687 = vmatpush1.msra.mxu0 0.0
    %688 = vmatprep.subr.mxu0 0.0
    %689 = vmatpush1.msra.mxu0 0.0
    %690 = vmatprep.subr.mxu0 0.0
    %691 = vmatpush1.msra.mxu0 0.0
    %692 = vmatprep.subr.mxu0 0.0
    %693 = vmatpush1.msra.mxu0 0.0
    %694 = vmatprep.subr.mxu0 0.0
    %695 = vmatpush1.msra.mxu0 0.0
    %696 = vmatprep.subr.mxu0 0.0
    %697 = vmatpush1.msra.mxu0 0.0
    %698 = vmatprep.subr.mxu0 0.0
    %699 = vmatpush1.msra.mxu0 0.0
    %700 = vmatprep.subr.mxu0 0.0
    %701 = vmatpush1.msra.mxu0 0.0
    %702 = vmatprep.subr.mxu0 0.0
    %703 = vmatpush1.msra.mxu0 0.0
    %704 = vmatprep.subr.mxu0 0.0
    %705 = vmatpush1.msra.mxu0 0.0
    %706 = vmatprep.subr.mxu0 0.0
    %707 = vmatpush1.msra.mxu0 0.0
    %708 = vmatprep.subr.mxu0 0.0
    %709 = vmatpush1.msra.mxu0 0.0
    %710 = vmatprep.mubr.f32.mxu0 0.0
    %711 = vmatmul.mubr.f32.gmra.mrb[0].mxu0 %v641
    %v712 = vpop.f32.mrb[0].mxu0
    %v713 = vadd.f32 %v74, %v712
    %v714 = vpop.f32.mrb[0].mxu0
    %715 = vmatprep.mubr.f32.mxu0 0.0
    %716 = vmatmul.mubr.f32.gmra.mrb[0].mxu0 %v644
    %v717 = vpop.f32.mrb[0].mxu0
    %v718 = vadd.f32 %v74, %v717
    %v719 = vpop.f32.mrb[0].mxu0
    %720 = vdwg.mxu0
    %v721 = vxor.u32 %v713, 2147483648
    %v722 = vxor.u32 %v718, 2147483648
    %v723 = vmul.f32 %v721, 1.442695
    %v724 = vpow.pop %v723
    %v725 = vmul.f32 %v722, 1.442695
    %v726 = vpow.pop %v725
    %v727 = vadd.f32 %v724, 1.0
    %v728 = vadd.f32 %v726, 1.0
    %v729 = vrcp.pop %v727
    %v730 = vmul.f32 1.0, %v729
    %v731 = vrcp.pop %v728
    %v732 = vmul.f32 1.0, %v731
    %733 = vrot.lane.b32.xlu0 %v468, 32
    %v734 = vpop.permute.xlu0 %733
    %735 = vrot.lane.b32.xlu0 %v469, 32
    %v736 = vpop.permute.xlu0 %735
    %v739 = vmul.f32 %v730, %v734
    %v740 = vmul.f32 %v732, %v736
    %743 = vrot.lane.b32.xlu0 %v739, 96
    %v744 = vpop.permute.xlu0 %743
    %745 = vrot.lane.b32.xlu0 %v740, 96
    %v746 = vpop.permute.xlu0 %745
    %v747 = vsel %vm249, %v744, 0
    %v749 = vsel %vm249, %v746, 0
    %751 = vmatprep.subr.mxu0 0.0
    %752 = vmatpush1.msra.mxu0 %v65
    %753 = vmatprep.subr.mxu0 0.0
    %754 = vmatpush1.msra.mxu0 %v66
    %755 = vmatprep.subr.mxu0 0.0
    %756 = vmatpush1.msra.mxu0 %v67
    %757 = vmatprep.subr.mxu0 0.0
    %758 = vmatpush1.msra.mxu0 %v68
    %759 = vmatprep.subr.mxu0 0.0
    %760 = vmatpush1.msra.mxu0 0.0
    %761 = vmatprep.subr.mxu0 0.0
    %762 = vmatpush1.msra.mxu0 0.0
    %763 = vmatprep.subr.mxu0 0.0
    %764 = vmatpush1.msra.mxu0 0.0
    %765 = vmatprep.subr.mxu0 0.0
    %766 = vmatpush1.msra.mxu0 0.0
    %767 = vmatprep.subr.mxu0 0.0
    %768 = vmatpush1.msra.mxu0 0.0
    %769 = vmatprep.subr.mxu0 0.0
    %770 = vmatpush1.msra.mxu0 0.0
    %771 = vmatprep.subr.mxu0 0.0
    %772 = vmatpush1.msra.mxu0 0.0
    %773 = vmatprep.subr.mxu0 0.0
    %774 = vmatpush1.msra.mxu0 0.0
    %775 = vmatprep.subr.mxu0 0.0
    %776 = vmatpush1.msra.mxu0 0.0
    %777 = vmatprep.subr.mxu0 0.0
    %778 = vmatpush1.msra.mxu0 0.0
    %779 = vmatprep.subr.mxu0 0.0
    %780 = vmatpush1.msra.mxu0 0.0
    %781 = vmatprep.subr.mxu0 0.0
    %782 = vmatpush1.msra.mxu0 0.0
    %783 = vmatprep.subr.mxu0 0.0
    %784 = vmatpush1.msra.mxu0 0.0
    %785 = vmatprep.subr.mxu0 0.0
    %786 = vmatpush1.msra.mxu0 0.0
    %787 = vmatprep.subr.mxu0 0.0
    %788 = vmatpush1.msra.mxu0 0.0
    %789 = vmatprep.subr.mxu0 0.0
    %790 = vmatpush1.msra.mxu0 0.0
    %791 = vmatprep.subr.mxu0 0.0
    %792 = vmatpush1.msra.mxu0 0.0
    %793 = vmatprep.subr.mxu0 0.0
    %794 = vmatpush1.msra.mxu0 0.0
    %795 = vmatprep.subr.mxu0 0.0
    %796 = vmatpush1.msra.mxu0 0.0
    %797 = vmatprep.subr.mxu0 0.0
    %798 = vmatpush1.msra.mxu0 0.0
    %799 = vmatprep.subr.mxu0 0.0
    %800 = vmatpush1.msra.mxu0 0.0
    %801 = vmatprep.subr.mxu0 0.0
    %802 = vmatpush1.msra.mxu0 0.0
    %803 = vmatprep.subr.mxu0 0.0
    %804 = vmatpush1.msra.mxu0 0.0
    %805 = vmatprep.subr.mxu0 0.0
    %806 = vmatpush1.msra.mxu0 0.0
    %807 = vmatprep.subr.mxu0 0.0
    %808 = vmatpush1.msra.mxu0 0.0
    %809 = vmatprep.subr.mxu0 0.0
    %810 = vmatpush1.msra.mxu0 0.0
    %811 = vmatprep.subr.mxu0 0.0
    %812 = vmatpush1.msra.mxu0 0.0
    %813 = vmatprep.subr.mxu0 0.0
    %814 = vmatpush1.msra.mxu0 0.0
    %815 = vmatprep.mubr.f32.mxu0 0.0
    %816 = vmatmul.mubr.f32.gmra.mrb[0].mxu0 %v747
    %v817 = vpop.f32.mrb[0].mxu0
    %v818 = vadd.f32 0.0, %v817
    %v819 = vpop.f32.mrb[0].mxu0
    %820 = vmatprep.mubr.f32.mxu0 0.0
    %821 = vmatmul.mubr.f32.gmra.mrb[0].mxu0 %v749
    %v822 = vpop.f32.mrb[0].mxu0
    %v823 = vadd.f32 0.0, %v822
    %v824 = vpop.f32.mrb[0].mxu0
    %825 = vdwg.mxu0
    %828 = vrot.lane.b32.xlu0 %v818, 64
    %v829 = vpop.permute.xlu0 %828
    %830 = vrot.lane.b32.xlu0 %v823, 64
    %v831 = vpop.permute.xlu0 %830
    %v834 = vadd.f32 %v713, %v829
    %v835 = vadd.f32 %v718, %v831
    %v836 = vtanh.pop %v834
    %v837 = vtanh.pop %v835
    %v838 = vsub.f32 1.0, %v730
    %v839 = vsub.f32 1.0, %v732
    %v840 = vmul.f32 %v838, %v468
    %v841 = vmul.f32 %v839, %v469
    %844 = vrot.lane.b32.xlu0 %v836, 64
    %v845 = vpop.permute.xlu0 %844
    %846 = vrot.lane.b32.xlu0 %v837, 64
    %v847 = vpop.permute.xlu0 %846
    %v850 = vmul.f32 %v730, %v845
    %v851 = vmul.f32 %v732, %v847
    %v852 = vadd.f32 %v840, %v850
    %v853 = vadd.f32 %v841, %v851
    %854 = vmatprep.subr.mxu0 0.0
    %855 = vmatpush1.msra.mxu0 %v852
    %856 = vmatprep.subr.mxu0 0.0
    %857 = vmatpush1.msra.mxu0 0.0
    %858 = vmatprep.subr.mxu0 0.0
    %859 = vmatpush1.msra.mxu0 0.0
    %860 = vmatprep.subr.mxu0 0.0
    %861 = vmatpush1.msra.mxu0 0.0
    %862 = vmatprep.subr.mxu0 0.0
    %863 = vmatpush1.msra.mxu0 0.0
    %864 = vmatprep.subr.mxu0 0.0
    %865 = vmatpush1.msra.mxu0 0.0
    %866 = vmatprep.subr.mxu0 0.0
    %867 = vmatpush1.msra.mxu0 0.0
    %868 = vmatprep.subr.mxu0 0.0
    %869 = vmatpush1.msra.mxu0 0.0
    %870 = vmatprep.subr.mxu0 0.0
    %871 = vmatpush1.msra.mxu0 0.0
    %872 = vmatprep.subr.mxu0 0.0
    %873 = vmatpush1.msra.mxu0 0.0
    %874 = vmatprep.subr.mxu0 0.0
    %875 = vmatpush1.msra.mxu0 0.0
    %876 = vmatprep.subr.mxu0 0.0
    %877 = vmatpush1.msra.mxu0 0.0
    %878 = vmatprep.subr.mxu0 0.0
    %879 = vmatpush1.msra.mxu0 0.0
    %880 = vmatprep.subr.mxu0 0.0
    %881 = vmatpush1.msra.mxu0 0.0
    %882 = vmatprep.subr.mxu0 0.0
    %883 = vmatpush1.msra.mxu0 0.0
    %884 = vmatprep.subr.mxu0 0.0
    %885 = vmatpush1.msra.mxu0 0.0
    %886 = vmatprep.subr.mxu0 0.0
    %887 = vmatpush1.msra.mxu0 0.0
    %888 = vmatprep.subr.mxu0 0.0
    %889 = vmatpush1.msra.mxu0 0.0
    %890 = vmatprep.subr.mxu0 0.0
    %891 = vmatpush1.msra.mxu0 0.0
    %892 = vmatprep.subr.mxu0 0.0
    %893 = vmatpush1.msra.mxu0 0.0
    %894 = vmatprep.subr.mxu0 0.0
    %895 = vmatpush1.msra.mxu0 0.0
    %896 = vmatprep.subr.mxu0 0.0
    %897 = vmatpush1.msra.mxu0 0.0
    %898 = vmatprep.subr.mxu0 0.0
    %899 = vmatpush1.msra.mxu0 0.0
    %900 = vmatprep.subr.mxu0 0.0
    %901 = vmatpush1.msra.mxu0 0.0
    %902 = vmatprep.subr.mxu0 0.0
    %903 = vmatpush1.msra.mxu0 0.0
    %904 = vmatprep.subr.mxu0 0.0
    %905 = vmatpush1.msra.mxu0 0.0
    %906 = vmatprep.subr.mxu0 0.0
    %907 = vmatpush1.msra.mxu0 0.0
    %908 = vmatprep.subr.mxu0 0.0
    %909 = vmatpush1.msra.mxu0 0.0
    %910 = vmatprep.subr.mxu0 0.0
    %911 = vmatpush1.msra.mxu0 0.0
    %912 = vmatprep.subr.mxu0 0.0
    %913 = vmatpush1.msra.mxu0 0.0
    %914 = vmatprep.subr.mxu0 0.0
    %915 = vmatpush1.msra.mxu0 0.0
    %916 = vmatprep.subr.mxu0 0.0
    %917 = vmatpush1.msra.mxu0 0.0
    %918 = vmatprep.mubr.f32.mxu0 0.0
    %919 = vmatmul.mubr.f32.gmra.mrb[0].mxu0 %v78
    %v920 = vpop.f32.mrb[0].mxu0
    %v921 = vadd.f32 0.0, %v920
    %v922 = vpop.f32.mrb[0].mxu0
    %923 = vmatprep.mubr.f32.mxu0 0.0
    %924 = vmatmul.mubr.f32.gmra.mrb[0].mxu0 %v81
    %v925 = vpop.f32.mrb[0].mxu0
    %v926 = vadd.f32 0.0, %v925
    %v927 = vpop.f32.mrb[0].mxu0
    %928 = vdwg.mxu0
    %929 = vmatprep.subr.mxu0 0.0
    %930 = vmatpush1.msra.mxu0 %v853
    %931 = vmatprep.subr.mxu0 0.0
    %932 = vmatpush1.msra.mxu0 0.0
    %933 = vmatprep.subr.mxu0 0.0
    %934 = vmatpush1.msra.mxu0 0.0
    %935 = vmatprep.subr.mxu0 0.0
    %936 = vmatpush1.msra.mxu0 0.0
    %937 = vmatprep.subr.mxu0 0.0
    %938 = vmatpush1.msra.mxu0 0.0
    %939 = vmatprep.subr.mxu0 0.0
    %940 = vmatpush1.msra.mxu0 0.0
    %941 = vmatprep.subr.mxu0 0.0
    %942 = vmatpush1.msra.mxu0 0.0
    %943 = vmatprep.subr.mxu0 0.0
    %944 = vmatpush1.msra.mxu0 0.0
    %945 = vmatprep.subr.mxu0 0.0
    %946 = vmatpush1.msra.mxu0 0.0
    %947 = vmatprep.subr.mxu0 0.0
    %948 = vmatpush1.msra.mxu0 0.0
    %949 = vmatprep.subr.mxu0 0.0
    %950 = vmatpush1.msra.mxu0 0.0
    %951 = vmatprep.subr.mxu0 0.0
    %952 = vmatpush1.msra.mxu0 0.0
    %953 = vmatprep.subr.mxu0 0.0
    %954 = vmatpush1.msra.mxu0 0.0
    %955 = vmatprep.subr.mxu0 0.0
    %956 = vmatpush1.msra.mxu0 0.0
    %957 = vmatprep.subr.mxu0 0.0
    %958 = vmatpush1.msra.mxu0 0.0
    %959 = vmatprep.subr.mxu0 0.0
    %960 = vmatpush1.msra.mxu0 0.0
    %961 = vmatprep.subr.mxu0 0.0
    %962 = vmatpush1.msra.mxu0 0.0
    %963 = vmatprep.subr.mxu0 0.0
    %964 = vmatpush1.msra.mxu0 0.0
    %965 = vmatprep.subr.mxu0 0.0
    %966 = vmatpush1.msra.mxu0 0.0
    %967 = vmatprep.subr.mxu0 0.0
    %968 = vmatpush1.msra.mxu0 0.0
    %969 = vmatprep.subr.mxu0 0.0
    %970 = vmatpush1.msra.mxu0 0.0
    %971 = vmatprep.subr.mxu0 0.0
    %972 = vmatpush1.msra.mxu0 0.0
    %973 = vmatprep.subr.mxu0 0.0
    %974 = vmatpush1.msra.mxu0 0.0
    %975 = vmatprep.subr.mxu0 0.0
    %976 = vmatpush1.msra.mxu0 0.0
    %977 = vmatprep.subr.mxu0 0.0
    %978 = vmatpush1.msra.mxu0 0.0
    %979 = vmatprep.subr.mxu0 0.0
    %980 = vmatpush1.msra.mxu0 0.0
    %981 = vmatprep.subr.mxu0 0.0
    %982 = vmatpush1.msra.mxu0 0.0
    %983 = vmatprep.subr.mxu0 0.0
    %984 = vmatpush1.msra.mxu0 0.0
    %985 = vmatprep.subr.mxu0 0.0
    %986 = vmatpush1.msra.mxu0 0.0
    %987 = vmatprep.subr.mxu0 0.0
    %988 = vmatpush1.msra.mxu0 0.0
    %989 = vmatprep.subr.mxu0 0.0
    %990 = vmatpush1.msra.mxu0 0.0
    %991 = vmatprep.subr.mxu0 0.0
    %992 = vmatpush1.msra.mxu0 0.0
    %993 = vmatprep.mubr.f32.mxu0 0.0
    %994 = vmatmul.mubr.f32.gmra.mrb[0].mxu0 %v78
    %v995 = vpop.f32.mrb[0].mxu0
    %v996 = vadd.f32 0.0, %v995
    %v997 = vpop.f32.mrb[0].mxu0
    %998 = vmatprep.mubr.f32.mxu0 0.0
    %999 = vmatmul.mubr.f32.gmra.mrb[0].mxu0 %v81
    %v1000 = vpop.f32.mrb[0].mxu0
    %v1001 = vadd.f32 0.0, %v1000
    %v1002 = vpop.f32.mrb[0].mxu0
    %1003 = vdwg.mxu0
    %1006 = vrot.lane.b32.xlu0 %v926, 32
    %v1007 = vpop.permute.xlu0 %1006
    %1008 = vrot.lane.b32.xlu0 %v1001, 32
    %v1009 = vpop.permute.xlu0 %1008
    %1014 = vrot.lane.b32.xlu0 %v852, 64
    %v1015 = vpop.permute.xlu0 %1014
    %1016 = vrot.lane.b32.xlu0 %v853, 64
    %v1017 = vpop.permute.xlu0 %1016
    %v1020 = vsel %vm249, %v921, %v1007
    %v1021 = vsel %vm249, %v996, %v1009
    %v1022 = vsel %vm252, %v1020, %v1015
    %v1023 = vsel %vm252, %v1021, %v1017
    %v1025 = vsel %vm255, %v1022, 0
    %v1028 = vsel %vm255, %v1023, 0
    %1030 = vmatprep.subr.mxu0 0.0
    %1031 = vmatpush1.msra.mxu0 %v53
    %1032 = vmatprep.subr.mxu0 0.0
    %1033 = vmatpush1.msra.mxu0 %v54
    %1034 = vmatprep.subr.mxu0 0.0
    %1035 = vmatpush1.msra.mxu0 %v55
    %1036 = vmatprep.subr.mxu0 0.0
    %1037 = vmatpush1.msra.mxu0 %v56
    %1038 = vmatprep.subr.mxu0 0.0
    %1039 = vmatpush1.msra.mxu0 %v57
    %1040 = vmatprep.subr.mxu0 0.0
    %1041 = vmatpush1.msra.mxu0 %v58
    %1042 = vmatprep.subr.mxu0 0.0
    %1043 = vmatpush1.msra.mxu0 %v59
    %1044 = vmatprep.subr.mxu0 0.0
    %1045 = vmatpush1.msra.mxu0 %v60
    %1046 = vmatprep.subr.mxu0 0.0
    %1047 = vmatpush1.msra.mxu0 %v61
    %1048 = vmatprep.subr.mxu0 0.0
    %1049 = vmatpush1.msra.mxu0 %v62
    %1050 = vmatprep.subr.mxu0 0.0
    %1051 = vmatpush1.msra.mxu0 %v63
    %1052 = vmatprep.subr.mxu0 0.0
    %1053 = vmatpush1.msra.mxu0 %v64
    %1054 = vmatprep.subr.mxu0 0.0
    %1055 = vmatpush1.msra.mxu0 0.0
    %1056 = vmatprep.subr.mxu0 0.0
    %1057 = vmatpush1.msra.mxu0 0.0
    %1058 = vmatprep.subr.mxu0 0.0
    %1059 = vmatpush1.msra.mxu0 0.0
    %1060 = vmatprep.subr.mxu0 0.0
    %1061 = vmatpush1.msra.mxu0 0.0
    %1062 = vmatprep.subr.mxu0 0.0
    %1063 = vmatpush1.msra.mxu0 0.0
    %1064 = vmatprep.subr.mxu0 0.0
    %1065 = vmatpush1.msra.mxu0 0.0
    %1066 = vmatprep.subr.mxu0 0.0
    %1067 = vmatpush1.msra.mxu0 0.0
    %1068 = vmatprep.subr.mxu0 0.0
    %1069 = vmatpush1.msra.mxu0 0.0
    %1070 = vmatprep.subr.mxu0 0.0
    %1071 = vmatpush1.msra.mxu0 0.0
    %1072 = vmatprep.subr.mxu0 0.0
    %1073 = vmatpush1.msra.mxu0 0.0
    %1074 = vmatprep.subr.mxu0 0.0
    %1075 = vmatpush1.msra.mxu0 0.0
    %1076 = vmatprep.subr.mxu0 0.0
    %1077 = vmatpush1.msra.mxu0 0.0
    %1078 = vmatprep.subr.mxu0 0.0
    %1079 = vmatpush1.msra.mxu0 0.0
    %1080 = vmatprep.subr.mxu0 0.0
    %1081 = vmatpush1.msra.mxu0 0.0
    %1082 = vmatprep.subr.mxu0 0.0
    %1083 = vmatpush1.msra.mxu0 0.0
    %1084 = vmatprep.subr.mxu0 0.0
    %1085 = vmatpush1.msra.mxu0 0.0
    %1086 = vmatprep.subr.mxu0 0.0
    %1087 = vmatpush1.msra.mxu0 0.0
    %1088 = vmatprep.subr.mxu0 0.0
    %1089 = vmatpush1.msra.mxu0 0.0
    %1090 = vmatprep.subr.mxu0 0.0
    %1091 = vmatpush1.msra.mxu0 0.0
    %1092 = vmatprep.subr.mxu0 0.0
    %1093 = vmatpush1.msra.mxu0 0.0
    %1094 = vmatprep.mubr.f32.mxu0 0.0
    %1095 = vmatmul.mubr.f32.gmra.mrb[0].mxu0 %v1025
    %v1096 = vpop.f32.mrb[0].mxu0
    %v1097 = vadd.f32 %v74, %v1096
    %v1098 = vpop.f32.mrb[0].mxu0
    %1099 = vmatprep.mubr.f32.mxu0 0.0
    %1100 = vmatmul.mubr.f32.gmra.mrb[0].mxu0 %v1028
    %v1101 = vpop.f32.mrb[0].mxu0
    %v1102 = vadd.f32 %v74, %v1101
    %v1103 = vpop.f32.mrb[0].mxu0
    %1104 = vdwg.mxu0
    %v1105 = vxor.u32 %v1097, 2147483648
    %v1106 = vxor.u32 %v1102, 2147483648
    %v1107 = vmul.f32 %v1105, 1.442695
    %v1108 = vpow.pop %v1107
    %v1109 = vmul.f32 %v1106, 1.442695
    %v1110 = vpow.pop %v1109
    %v1111 = vadd.f32 %v1108, 1.0
    %v1112 = vadd.f32 %v1110, 1.0
    %v1113 = vrcp.pop %v1111
    %v1114 = vmul.f32 1.0, %v1113
    %v1115 = vrcp.pop %v1112
    %v1116 = vmul.f32 1.0, %v1115
    %1117 = vrot.lane.b32.xlu0 %v852, 32
    %v1118 = vpop.permute.xlu0 %1117
    %1119 = vrot.lane.b32.xlu0 %v853, 32
    %v1120 = vpop.permute.xlu0 %1119
    %v1123 = vmul.f32 %v1114, %v1118
    %v1124 = vmul.f32 %v1116, %v1120
    %1127 = vrot.lane.b32.xlu0 %v1123, 96
    %v1128 = vpop.permute.xlu0 %1127
    %1129 = vrot.lane.b32.xlu0 %v1124, 96
    %v1130 = vpop.permute.xlu0 %1129
    %v1131 = vsel %vm249, %v1128, 0
    %v1133 = vsel %vm249, %v1130, 0
    %1135 = vmatprep.subr.mxu0 0.0
    %1136 = vmatpush1.msra.mxu0 %v65
    %1137 = vmatprep.subr.mxu0 0.0
    %1138 = vmatpush1.msra.mxu0 %v66
    %1139 = vmatprep.subr.mxu0 0.0
    %1140 = vmatpush1.msra.mxu0 %v67
    %1141 = vmatprep.subr.mxu0 0.0
    %1142 = vmatpush1.msra.mxu0 %v68
    %1143 = vmatprep.subr.mxu0 0.0
    %1144 = vmatpush1.msra.mxu0 0.0
    %1145 = vmatprep.subr.mxu0 0.0
    %1146 = vmatpush1.msra.mxu0 0.0
    %1147 = vmatprep.subr.mxu0 0.0
    %1148 = vmatpush1.msra.mxu0 0.0
    %1149 = vmatprep.subr.mxu0 0.0
    %1150 = vmatpush1.msra.mxu0 0.0
    %1151 = vmatprep.subr.mxu0 0.0
    %1152 = vmatpush1.msra.mxu0 0.0
    %1153 = vmatprep.subr.mxu0 0.0
    %1154 = vmatpush1.msra.mxu0 0.0
    %1155 = vmatprep.subr.mxu0 0.0
    %1156 = vmatpush1.msra.mxu0 0.0
    %1157 = vmatprep.subr.mxu0 0.0
    %1158 = vmatpush1.msra.mxu0 0.0
    %1159 = vmatprep.subr.mxu0 0.0
    %1160 = vmatpush1.msra.mxu0 0.0
    %1161 = vmatprep.subr.mxu0 0.0
    %1162 = vmatpush1.msra.mxu0 0.0
    %1163 = vmatprep.subr.mxu0 0.0
    %1164 = vmatpush1.msra.mxu0 0.0
    %1165 = vmatprep.subr.mxu0 0.0
    %1166 = vmatpush1.msra.mxu0 0.0
    %1167 = vmatprep.subr.mxu0 0.0
    %1168 = vmatpush1.msra.mxu0 0.0
    %1169 = vmatprep.subr.mxu0 0.0
    %1170 = vmatpush1.msra.mxu0 0.0
    %1171 = vmatprep.subr.mxu0 0.0
    %1172 = vmatpush1.msra.mxu0 0.0
    %1173 = vmatprep.subr.mxu0 0.0
    %1174 = vmatpush1.msra.mxu0 0.0
    %1175 = vmatprep.subr.mxu0 0.0
    %1176 = vmatpush1.msra.mxu0 0.0
    %1177 = vmatprep.subr.mxu0 0.0
    %1178 = vmatpush1.msra.mxu0 0.0
    %1179 = vmatprep.subr.mxu0 0.0
    %1180 = vmatpush1.msra.mxu0 0.0
    %1181 = vmatprep.subr.mxu0 0.0
    %1182 = vmatpush1.msra.mxu0 0.0
    %1183 = vmatprep.subr.mxu0 0.0
    %1184 = vmatpush1.msra.mxu0 0.0
    %1185 = vmatprep.subr.mxu0 0.0
    %1186 = vmatpush1.msra.mxu0 0.0
    %1187 = vmatprep.subr.mxu0 0.0
    %1188 = vmatpush1.msra.mxu0 0.0
    %1189 = vmatprep.subr.mxu0 0.0
    %1190 = vmatpush1.msra.mxu0 0.0
    %1191 = vmatprep.subr.mxu0 0.0
    %1192 = vmatpush1.msra.mxu0 0.0
    %1193 = vmatprep.subr.mxu0 0.0
    %1194 = vmatpush1.msra.mxu0 0.0
    %1195 = vmatprep.subr.mxu0 0.0
    %1196 = vmatpush1.msra.mxu0 0.0
    %1197 = vmatprep.subr.mxu0 0.0
    %1198 = vmatpush1.msra.mxu0 0.0
    %1199 = vmatprep.mubr.f32.mxu0 0.0
    %1200 = vmatmul.mubr.f32.gmra.mrb[0].mxu0 %v1131
    %v1201 = vpop.f32.mrb[0].mxu0
    %v1202 = vadd.f32 0.0, %v1201
    %v1203 = vpop.f32.mrb[0].mxu0
    %1204 = vmatprep.mubr.f32.mxu0 0.0
    %1205 = vmatmul.mubr.f32.gmra.mrb[0].mxu0 %v1133
    %v1206 = vpop.f32.mrb[0].mxu0
    %v1207 = vadd.f32 0.0, %v1206
    %v1208 = vpop.f32.mrb[0].mxu0
    %1209 = vdwg.mxu0
    %1212 = vrot.lane.b32.xlu0 %v1202, 64
    %v1213 = vpop.permute.xlu0 %1212
    %1214 = vrot.lane.b32.xlu0 %v1207, 64
    %v1215 = vpop.permute.xlu0 %1214
    %v1218 = vadd.f32 %v1097, %v1213
    %v1219 = vadd.f32 %v1102, %v1215
    %v1220 = vtanh.pop %v1218
    %v1221 = vtanh.pop %v1219
    %v1222 = vsub.f32 1.0, %v1114
    %v1223 = vsub.f32 1.0, %v1116
    %v1224 = vmul.f32 %v1222, %v852
    %v1225 = vmul.f32 %v1223, %v853
    %1228 = vrot.lane.b32.xlu0 %v1220, 64
    %v1229 = vpop.permute.xlu0 %1228
    %1230 = vrot.lane.b32.xlu0 %v1221, 64
    %v1231 = vpop.permute.xlu0 %1230
    %v1234 = vmul.f32 %v1114, %v1229
    %v1235 = vmul.f32 %v1116, %v1231
    %v1236 = vadd.f32 %v1224, %v1234
    %v1237 = vadd.f32 %v1225, %v1235
    %1238 = vst.msk [vmem:[#allocation7] sm:$0xff] %vm249, %v1236
    %1239 = vst.msk [vmem:[#allocation7 + $0x8] sm:$0xff] %vm249, %v1237
    // Predicated region
    $region30: #{tpu_custom_call.1} parent=1 // pred_check
      _
    $region31: #{tpu_custom_call.1} parent=1 // pred_check_branch
      %1241 = sbr.rel (0) target = $region33
    $region32: #{tpu_custom_call.1} parent=1 // pred_region
      %s1243 = ssub.s32 256, 256
      %1244 = vsyncadd [#allocation4], %s1243
      %s1245 = sshll.u32 [#allocation7], 4
      %s1246 = int_to_ptr.vmem [resolvable:$true] %s1245
      %1251 = dma.vmem_to_hbm [thread:$0]  %s1246, 256, %s5, [#allocation4], 128, 128, 8
    $region33: #{tpu_custom_call.1} parent=1 // pred_fallthru
      _
    // Predicated region
    $region34: #{tpu_custom_call.1} parent=1 // pred_check
      _
    $region35: #{tpu_custom_call.1} parent=1 // pred_check_branch
      %1253 = sbr.rel (0) target = $region37
    $region36: #{tpu_custom_call.1} parent=1 // pred_region
      %1254 = dma.done [#allocation4], 256
    $region37: #{tpu_custom_call.1} parent=1 // pred_fallthru
      _
    %1255 = vsyncpa [#allocation3], 1
    %1256 = vsyncpa [#allocation6], 1
    %1257 = vsyncpa [#allocation4], 1

</llo_original>
